<compile_context>
chip_gen: v5e
topology: v5e:2x2
jax: 0.10.0
libtpu: 0.0.40
codegen_flags: <defaults>
</compile_context>

<pallas_src>
import jax
import jax.numpy as jnp
from jax.experimental import pallas as pl
from jax.experimental.pallas import tpu as pltpu


def _round_up(x, m):
    return ((x + m - 1) // m) * m


def _make_kernel(overlap):
    """Build the kernel body; `overlap` selects cross-step double-buffered x DMA."""

    def kernel(x_hbm, w_ref, b_ref, o_ref, xbuf, sem):
        # x_hbm: (B, Lp+2, Dp)    zero-padded activations, left in HBM (pl.ANY)
        # w_ref: (3, Dp, TN)      tap k: input-channel -> output-channel tile (resident per j)
        # b_ref: (1, TN)          f32 bias slice
        # o_ref: (1, TL, TN)
        # xbuf : (nbuf, TL+2, Dp) VMEM halo-window scratch
        # sem  : (nbuf,)          DMA semaphores
        b = pl.program_id(1)
        i = pl.program_id(2)
        n_i = pl.num_programs(2)
        tl = o_ref.shape[1]
        win = xbuf.shape[1]  # TL + 2

        def start_fetch(idx, slot):
            row0 = idx * tl
            if not isinstance(row0, int):
                row0 = pl.multiple_of(row0, tl)
            pltpu.make_async_copy(
                x_hbm.at[b, pl.ds(row0, win), :], xbuf.at[slot], sem.at[slot]
            ).start()

        def wait_fetch(slot):
            pltpu.make_async_copy(
                x_hbm.at[0, pl.ds(0, win), :], xbuf.at[slot], sem.at[slot]
            ).wait()

        if overlap:
            # Double-buffer along the L-tile axis (complete per core: i is "arbitrary",
            # only B is megacore-parallel), overlapping next-window DMA with compute.
            slot = i % 2

            @pl.when(i == 0)
            def _():
                start_fetch(0, 0)

            @pl.when(i + 1 < n_i)
            def _():
                start_fetch(i + 1, 1 - slot)

            wait_fetch(slot)
            cur = xbuf.at[slot]
        else:
            # Blocking fetch each step: no cross-step state, every axis splittable.
            start_fetch(i, 0)
            wait_fetch(0)
            cur = xbuf.at[0]

        # k=3, padding=1 conv == 3 sublane-shifted MXU matmuls (taps l-1, l, l+1).
        x_left = cur[pl.ds(0, tl), :]
        x_mid = cur[pl.ds(1, tl), :]
        x_right = cur[pl.ds(2, tl), :]

        acc = jnp.dot(x_left, w_ref[0], preferred_element_type=jnp.float32)
        acc = acc + jnp.dot(x_mid, w_ref[1], preferred_element_type=jnp.float32)
        acc = acc + jnp.dot(x_right, w_ref[2], preferred_element_type=jnp.float32)
        acc = acc + b_ref[...]                    # f32 bias, broadcast (1, TN)
        o_ref[0] = jnp.maximum(acc, 0.0).astype(o_ref.dtype)

    return kernel


def prepare_pattern_matcher_params(weight, bias, dtype):
    """One-time param prep: torch (D_out, D_in, 3) -> padded (3, Dp, Dp) + f32 (1, Dp) bias.

    Call this once per parameter set and reuse the result across forward calls.
    """
    d_out, d_in, _ = weight.shape
    dp = _round_up(max(d_in, d_out), 128)
    w = jnp.transpose(weight, (2, 1, 0)).astype(dtype)        # (3, D_in, D_out)
    w = jnp.pad(w, ((0, 0), (0, dp - d_in), (0, dp - d_out)))
    b = jnp.pad(bias.astype(jnp.float32), (0, dp - d_out)).reshape(1, dp)
    return w, b


def pattern_matcher_prepped(x, w_p, b_p, d_out, *, tl=512, tn=None,
                            max_resident_weight_bytes=8 * 2 ** 20):
    """x: (B, L, D_in); w_p/b_p from prepare_pattern_matcher_params; returns (B, L, d_out)."""
    B, L, D = x.shape
    dtype = x.dtype
    itm = x.dtype.itemsize
    Dp = w_p.shape[1]
    assert w_p.shape == (3, Dp, Dp) and Dp % 128 == 0 and D <= Dp

    # ---- tile sizes (lane-dense, MXU-aligned) --------------------------------
    TL = tl if L >= tl else _round_up(L, 8)
    TL = _round_up(TL, 8)
    Lp = _round_up(L, TL)
    nL = Lp // TL

    if tn is not None:
        assert Dp % tn == 0 and tn % 128 == 0
        TN = tn
    elif 3 * Dp * Dp * itm <= max_resident_weight_bytes:
        TN = Dp                                  # whole weight resident in VMEM
    else:
        TN = 128                                 # keep each weight tile <= ~6 MiB
        for cand in (512, 384, 256, 128):
            if Dp % cand == 0 and 3 * Dp * cand * itm <= 6 * 2 ** 20:
                TN = cand
                break
    nJ = Dp // TN

    # ---- zero-padded input: conv padding=1 + tile/lane padding ---------------
    x_p = jnp.pad(x, ((0, 0), (1, 1 + Lp - L), (0, Dp - D)))   # (B, Lp+2, Dp)

    # ---- kernel variant & megacore semantics ---------------------------------
    overlap = B > 1        # cross-step x prefetch needs the L-tile loop intact per core
    nbuf = 2 if overlap else 1
    dims = ("arbitrary", "parallel", "arbitrary") if overlap \
        else ("arbitrary", "parallel", "parallel")

    # ---- VMEM budget (cap 48 MiB: headroom under v7x's 64 MiB/TC) ------------
    win = TL + 2
    need = (nbuf * _round_up(win, 8) * Dp * itm      # x halo windows
            + 2 * 3 * Dp * TN * itm                  # weight (pipeline double-buffer)
            + 2 * 8 * TN * 4                         # bias (sublane padded)
            + 2 * TL * TN * itm                      # output tile
            + 2 * TL * TN * 4)                       # f32 accumulator intermediates
    vmem_limit = int(min(48 * 2 ** 20, max(16 * 2 ** 20, need + 4 * 2 ** 20)))

    cost = pl.CostEstimate(
        flops=2 * B * Lp * 3 * Dp * Dp,
        transcendentals=0,
        bytes_accessed=int(nJ * B * (Lp + 2) * Dp * itm   # activation windows (per j)
                           + 3 * Dp * Dp * itm            # weights fetched once per tile
                           + Dp * 4                       # bias
                           + B * Lp * Dp * itm),          # output
    )

    out = pl.pallas_call(
        _make_kernel(overlap),
        out_shape=jax.ShapeDtypeStruct((B, Lp, Dp), dtype),
        grid_spec=pltpu.PrefetchScalarGridSpec(
            num_scalar_prefetch=0,
            # D_out-tile axis OUTERMOST: weight/bias block indices only change with j,
            # so they are re-DMA'd only nJ times per core (once when nJ == 1).
            grid=(nJ, B, nL),
            in_specs=[
                pl.BlockSpec(memory_space=pl.ANY),                      # x: manual halo DMA
                pl.BlockSpec((3, Dp, TN), lambda j, b, i: (0, 0, j)),   # weights
                pl.BlockSpec((1, TN), lambda j, b, i: (0, j)),          # bias
            ],
            out_specs=pl.BlockSpec((1, TL, TN), lambda j, b, i: (b, i, j)),
            scratch_shapes=[
                pltpu.VMEM((nbuf, win, Dp), dtype),
                pltpu.SemaphoreType.DMA((nbuf,)),
            ],
        ),
        compiler_params=pltpu.CompilerParams(
            dimension_semantics=dims,
            vmem_limit_bytes=vmem_limit,
        ),
        cost_estimate=cost,
    )(x_p, w_p, b_p)

    if Lp != L or Dp != d_out:
        out = out[:, :L, :d_out]
    return out


def pattern_matcher(x, weight, bias, **kwargs):
    """x: (B, L, D); weight: (D_out, D_in, 3) [PyTorch Conv1d layout]; bias: (D_out,).

    == relu(Conv1d(d_model, d_model, 3, padding=1)(x.permute(0,2,1))).permute(0,2,1).
    In a real model call prepare_pattern_matcher_params once and reuse w_p / b_p.
    """
    w_p, b_p = prepare_pattern_matcher_params(weight, bias, x.dtype)
    return pattern_matcher_prepped(x, w_p, b_p, weight.shape[0], **kwargs)


def _reference(x, weight, bias):
    """Pure-JAX reference matching torch: relu(conv1d(x.permute(0,2,1))).permute(0,2,1)."""
    xf = x.astype(jnp.float32)
    pad = jnp.pad(xf, ((0, 0), (1, 1), (0, 0)))
    out = (
        jnp.einsum("bld,de->ble", pad[:, :-2, :], weight[:, :, 0].T)
        + jnp.einsum("bld,de->ble", pad[:, 1:-1, :], weight[:, :, 1].T)
        + jnp.einsum("bld,de->ble", pad[:, 2:, :], weight[:, :, 2].T)
        + bias[None, None, :]
    )
    return jnp.maximum(out, 0.0).astype(x.dtype)


if __name__ == "__main__":
    base_key = jax.random.PRNGKey(0)

    def _run_case(case_id, B, L, D, tl, tn=None):
        key = jax.random.fold_in(base_key, case_id)
        kx, kw, kb = jax.random.split(key, 3)
        x = jax.random.normal(kx, (B, L, D), dtype=jnp.float32)
        # Deterministic Conv1d-style init: uniform(+/- 1/sqrt(fan_in)), fan_in = D*3.
        bound = 1.0 / jnp.sqrt(jnp.float32(D * 3))
        weight = jax.random.uniform(kw, (D, D, 3), jnp.float32, -bound, bound)
        bias = jax.random.uniform(kb, (D,), jnp.float32, -bound, bound)

        kwargs = dict(tl=tl)
        if tn is not None:
            kwargs["tn"] = tn
        out = jax.block_until_ready(pattern_matcher(x, weight, bias, **kwargs))
        ref = _reference(x, weight, bias)
        assert out.shape == (B, L, D), (out.shape, (B, L, D))
        assert jnp.allclose(out, ref, atol=1e-4, rtol=1e-4), \
            f"mismatch vs reference (case {case_id}: B={B} L={L} D={D})"

    # 1) overlap (double-buffered halo DMA) path, multiple L tiles, resident weight.
    _run_case(0, B=2, L=24, D=32, tl=8)
    # 2) B == 1: blocking-fetch path, every grid axis megacore-splittable.
    _run_case(1, B=1, L=16, D=32, tl=8)
    # 3) D_out-tiled weight path (nJ > 1) + channel padding (D=200 -> Dp=256, TN=128).
    _run_case(2, B=2, L=24, D=200, tl=8, tn=128)

    print("KERNEL_OK")
</pallas_src>

<mosaic_0001>
module attributes {stable_mosaic.version = 11 : i64} {
  func.func @kernel(%arg0: i32, %arg1: i32, %arg2: i32, %arg3: memref<2x26x128xf32, #tpu.memory_space<any>>, %arg4: memref<3x128x128xf32, #tpu.memory_space<vmem>>, %arg5: memref<1x128xf32, #tpu.memory_space<vmem>>, %arg6: memref<1x8x128xf32, #tpu.memory_space<vmem>>, %arg7: memref<2x10x128xf32, #tpu.memory_space<vmem>>, %arg8: memref<2x!tpu.dma_semaphore, #tpu.memory_space<semaphore_mem>>) attributes {dimension_semantics = [#tpu.dimension_semantics<arbitrary>, #tpu.dimension_semantics<parallel>, #tpu.dimension_semantics<arbitrary>], iteration_bounds = array<i64: 1, 2, 3>, scalar_prefetch = 0 : i64, scratch_operands = 2 : i64, tpu.core_type = #tpu.core_type<tc>, window_params = [{}, {transform_indices = @transform_1, window_bounds = array<i64: 3, 128, 128>}, {transform_indices = @transform_2, window_bounds = array<i64: 1, 128>}, {transform_indices = @transform_3, window_bounds = array<i64: 1, 8, 128>}]} {
    %c2_i32 = arith.constant 2 : i32
    %c0_i32 = arith.constant 0 : i32
    %0 = arith.cmpi eq, %c2_i32, %c0_i32 : i32
    %c1_i32 = arith.constant 1 : i32
    %1 = arith.select %0, %c1_i32, %c2_i32 : i32
    %2 = arith.remsi %arg2, %1 : i32
    %c0_i32_0 = arith.constant 0 : i32
    %3 = arith.cmpi ne, %2, %c0_i32_0 : i32
    %c0_i32_1 = arith.constant 0 : i32
    %4 = arith.cmpi slt, %2, %c0_i32_1 : i32
    %c0_i32_2 = arith.constant 0 : i32
    %5 = arith.cmpi slt, %1, %c0_i32_2 : i32
    %6 = arith.xori %4, %5 : i1
    %7 = arith.andi %6, %3 : i1
    %8 = arith.addi %2, %1 : i32
    %9 = arith.select %7, %8, %2 : i32
    %c0_i32_3 = arith.constant 0 : i32
    %10 = arith.cmpi eq, %arg2, %c0_i32_3 : i32
    %11 = arith.extui %10 : i1 to i32
    %c0_i32_4 = arith.constant 0 : i32
    %12 = arith.cmpi ne, %11, %c0_i32_4 : i32
    scf.if %12 {
      %c0_i32_38 = arith.constant 0 : i32
      %c0_i32_39 = arith.constant 0 : i32
      %c0_i32_40 = arith.constant 0 : i32
      %c0_i32_41 = arith.constant 0 : i32
      %51 = tpu.memref_slice %arg3[%arg1, %c0_i32_40, %c0_i32_41] : memref<2x26x128xf32, #tpu.memory_space<any>> -> memref<1x10x128xf32, #tpu.memory_space<any>>
      %52 = tpu.memref_squeeze %51 : memref<1x10x128xf32, #tpu.memory_space<any>> -> memref<10x128xf32, #tpu.memory_space<any>>
      %c0_i32_42 = arith.constant 0 : i32
      %c0_i32_43 = arith.constant 0 : i32
      %53 = tpu.memref_slice %arg7[%c0_i32_38, %c0_i32_42, %c0_i32_43] : memref<2x10x128xf32, #tpu.memory_space<vmem>> -> memref<1x10x128xf32, #tpu.memory_space<vmem>>
      %54 = tpu.memref_squeeze %53 : memref<1x10x128xf32, #tpu.memory_space<vmem>> -> memref<10x128xf32, #tpu.memory_space<vmem>>
      %55 = tpu.memref_slice %arg8[%c0_i32_39] : memref<2x!tpu.dma_semaphore, #tpu.memory_space<semaphore_mem>> -> memref<1x!tpu.dma_semaphore, #tpu.memory_space<semaphore_mem>>
      %56 = tpu.memref_squeeze %55 : memref<1x!tpu.dma_semaphore, #tpu.memory_space<semaphore_mem>> -> memref<!tpu.dma_semaphore, #tpu.memory_space<semaphore_mem>>
      tpu.enqueue_dma source(%52 : memref<10x128xf32, #tpu.memory_space<any>>) target(%54 : memref<10x128xf32, #tpu.memory_space<vmem>>) target_semaphore(%56 : memref<!tpu.dma_semaphore, #tpu.memory_space<semaphore_mem>>)
    } else {
    }
    %c1_i32_5 = arith.constant 1 : i32
    %13 = arith.addi %arg2, %c1_i32_5 : i32
    %c3_i32 = arith.constant 3 : i32
    %14 = arith.cmpi slt, %13, %c3_i32 : i32
    %15 = arith.extui %14 : i1 to i32
    %c0_i32_6 = arith.constant 0 : i32
    %16 = arith.cmpi ne, %15, %c0_i32_6 : i32
    scf.if %16 {
      %c1_i32_38 = arith.constant 1 : i32
      %51 = arith.addi %arg2, %c1_i32_38 : i32
      %c1_i32_39 = arith.constant 1 : i32
      %52 = arith.subi %c1_i32_39, %9 : i32
      %c8_i32 = arith.constant 8 : i32
      %53 = arith.muli %51, %c8_i32 : i32
      %54 = tpu.assume_multiple %53, 8 : i32
      %c0_i32_40 = arith.constant 0 : i32
      %55 = tpu.memref_slice %arg3[%arg1, %54, %c0_i32_40] : memref<2x26x128xf32, #tpu.memory_space<any>> -> memref<1x10x128xf32, #tpu.memory_space<any>>
      %56 = tpu.memref_squeeze %55 : memref<1x10x128xf32, #tpu.memory_space<any>> -> memref<10x128xf32, #tpu.memory_space<any>>
      %c0_i32_41 = arith.constant 0 : i32
      %c0_i32_42 = arith.constant 0 : i32
      %57 = tpu.memref_slice %arg7[%52, %c0_i32_41, %c0_i32_42] : memref<2x10x128xf32, #tpu.memory_space<vmem>> -> memref<1x10x128xf32, #tpu.memory_space<vmem>>
      %58 = tpu.memref_squeeze %57 : memref<1x10x128xf32, #tpu.memory_space<vmem>> -> memref<10x128xf32, #tpu.memory_space<vmem>>
      %59 = tpu.memref_slice %arg8[%52] : memref<2x!tpu.dma_semaphore, #tpu.memory_space<semaphore_mem>> -> memref<1x!tpu.dma_semaphore, #tpu.memory_space<semaphore_mem>>
      %60 = tpu.memref_squeeze %59 : memref<1x!tpu.dma_semaphore, #tpu.memory_space<semaphore_mem>> -> memref<!tpu.dma_semaphore, #tpu.memory_space<semaphore_mem>>
      tpu.enqueue_dma source(%56 : memref<10x128xf32, #tpu.memory_space<any>>) target(%58 : memref<10x128xf32, #tpu.memory_space<vmem>>) target_semaphore(%60 : memref<!tpu.dma_semaphore, #tpu.memory_space<semaphore_mem>>)
    } else {
    }
    %c0_i32_7 = arith.constant 0 : i32
    %c0_i32_8 = arith.constant 0 : i32
    %c0_i32_9 = arith.constant 0 : i32
    %17 = tpu.memref_slice %arg3[%c0_i32_7, %c0_i32_8, %c0_i32_9] : memref<2x26x128xf32, #tpu.memory_space<any>> -> memref<1x10x128xf32, #tpu.memory_space<any>>
    %18 = tpu.memref_squeeze %17 : memref<1x10x128xf32, #tpu.memory_space<any>> -> memref<10x128xf32, #tpu.memory_space<any>>
    %c0_i32_10 = arith.constant 0 : i32
    %c0_i32_11 = arith.constant 0 : i32
    %19 = tpu.memref_slice %arg7[%9, %c0_i32_10, %c0_i32_11] : memref<2x10x128xf32, #tpu.memory_space<vmem>> -> memref<1x10x128xf32, #tpu.memory_space<vmem>>
    %20 = tpu.memref_squeeze %19 : memref<1x10x128xf32, #tpu.memory_space<vmem>> -> memref<10x128xf32, #tpu.memory_space<vmem>>
    %21 = tpu.memref_slice %arg8[%9] : memref<2x!tpu.dma_semaphore, #tpu.memory_space<semaphore_mem>> -> memref<1x!tpu.dma_semaphore, #tpu.memory_space<semaphore_mem>>
    %22 = tpu.memref_squeeze %21 : memref<1x!tpu.dma_semaphore, #tpu.memory_space<semaphore_mem>> -> memref<!tpu.dma_semaphore, #tpu.memory_space<semaphore_mem>>
    tpu.wait_dma2 semaphore(%22 : memref<!tpu.dma_semaphore, #tpu.memory_space<semaphore_mem>>) src(%18 : memref<10x128xf32, #tpu.memory_space<any>>) dst(%20 : memref<10x128xf32, #tpu.memory_space<vmem>>)
    %c0_i32_12 = arith.constant 0 : i32
    %c0_i32_13 = arith.constant 0 : i32
    %23 = tpu.memref_slice %arg7[%9, %c0_i32_12, %c0_i32_13] : memref<2x10x128xf32, #tpu.memory_space<vmem>> -> memref<1x10x128xf32, #tpu.memory_space<vmem>>
    %24 = tpu.memref_squeeze %23 : memref<1x10x128xf32, #tpu.memory_space<vmem>> -> memref<10x128xf32, #tpu.memory_space<vmem>>
    %c0 = arith.constant 0 : index
    %c0_14 = arith.constant 0 : index
    %25 = vector.load %24[%c0, %c0_14] : memref<10x128xf32, #tpu.memory_space<vmem>>, vector<8x128xf32>
    %c0_i32_15 = arith.constant 0 : i32
    %c0_i32_16 = arith.constant 0 : i32
    %26 = tpu.memref_slice %arg7[%9, %c0_i32_15, %c0_i32_16] : memref<2x10x128xf32, #tpu.memory_space<vmem>> -> memref<1x10x128xf32, #tpu.memory_space<vmem>>
    %27 = tpu.memref_squeeze %26 : memref<1x10x128xf32, #tpu.memory_space<vmem>> -> memref<10x128xf32, #tpu.memory_space<vmem>>
    %c1 = arith.constant 1 : index
    %c0_17 = arith.constant 0 : index
    %28 = vector.load %27[%c1, %c0_17] : memref<10x128xf32, #tpu.memory_space<vmem>>, vector<8x128xf32>
    %c0_i32_18 = arith.constant 0 : i32
    %c0_i32_19 = arith.constant 0 : i32
    %29 = tpu.memref_slice %arg7[%9, %c0_i32_18, %c0_i32_19] : memref<2x10x128xf32, #tpu.memory_space<vmem>> -> memref<1x10x128xf32, #tpu.memory_space<vmem>>
    %30 = tpu.memref_squeeze %29 : memref<1x10x128xf32, #tpu.memory_space<vmem>> -> memref<10x128xf32, #tpu.memory_space<vmem>>
    %c2 = arith.constant 2 : index
    %c0_20 = arith.constant 0 : index
    %31 = vector.load %30[%c2, %c0_20] : memref<10x128xf32, #tpu.memory_space<vmem>>, vector<8x128xf32>
    %c0_21 = arith.constant 0 : index
    %c0_22 = arith.constant 0 : index
    %c0_23 = arith.constant 0 : index
    %32 = vector.load %arg4[%c0_21, %c0_22, %c0_23] : memref<3x128x128xf32, #tpu.memory_space<vmem>>, vector<1x128x128xf32>
    %33 = vector.shape_cast %32 : vector<1x128x128xf32> to vector<128x128xf32>
    %cst = arith.constant dense<0.000000e+00> : vector<8x128xf32>
    %34 = tpu.matmul %25, %33, %cst {dimension_numbers = #tpu.dot_dimension_numbers<[1], [0], [0], [1], [0, 0, 1, 1], [], []>} : vector<8x128xf32>, vector<128x128xf32>, vector<8x128xf32> -> vector<8x128xf32>
    %c1_24 = arith.constant 1 : index
    %c0_25 = arith.constant 0 : index
    %c0_26 = arith.constant 0 : index
    %35 = vector.load %arg4[%c1_24, %c0_25, %c0_26] : memref<3x128x128xf32, #tpu.memory_space<vmem>>, vector<1x128x128xf32>
    %36 = vector.shape_cast %35 : vector<1x128x128xf32> to vector<128x128xf32>
    %cst_27 = arith.constant dense<0.000000e+00> : vector<8x128xf32>
    %37 = tpu.matmul %28, %36, %cst_27 {dimension_numbers = #tpu.dot_dimension_numbers<[1], [0], [0], [1], [0, 0, 1, 1], [], []>} : vector<8x128xf32>, vector<128x128xf32>, vector<8x128xf32> -> vector<8x128xf32>
    %38 = arith.addf %34, %37 : vector<8x128xf32>
    %c2_28 = arith.constant 2 : index
    %c0_29 = arith.constant 0 : index
    %c0_30 = arith.constant 0 : index
    %39 = vector.load %arg4[%c2_28, %c0_29, %c0_30] : memref<3x128x128xf32, #tpu.memory_space<vmem>>, vector<1x128x128xf32>
    %40 = vector.shape_cast %39 : vector<1x128x128xf32> to vector<128x128xf32>
    %cst_31 = arith.constant dense<0.000000e+00> : vector<8x128xf32>
    %41 = tpu.matmul %31, %40, %cst_31 {dimension_numbers = #tpu.dot_dimension_numbers<[1], [0], [0], [1], [0, 0, 1, 1], [], []>} : vector<8x128xf32>, vector<128x128xf32>, vector<8x128xf32> -> vector<8x128xf32>
    %42 = arith.addf %38, %41 : vector<8x128xf32>
    %c0_32 = arith.constant 0 : index
    %c0_33 = arith.constant 0 : index
    %43 = vector.load %arg5[%c0_32, %c0_33] : memref<1x128xf32, #tpu.memory_space<vmem>>, vector<1x128xf32>
    %44 = vector.broadcast %43 : vector<1x128xf32> to vector<8x128xf32>
    %45 = arith.addf %42, %44 : vector<8x128xf32>
    %cst_34 = arith.constant 0.000000e+00 : f32
    %46 = vector.broadcast %cst_34 : f32 to vector<8x128xf32>
    %47 = arith.maximumf %45, %46 : vector<8x128xf32>
    %c0_35 = arith.constant 0 : index
    %c0_36 = arith.constant 0 : index
    %c0_37 = arith.constant 0 : index
    %48 = vector.load %arg6[%c0_35, %c0_36, %c0_37] : memref<1x8x128xf32, #tpu.memory_space<vmem>>, vector<1x8x128xf32>
    %49 = vector.shape_cast %48 : vector<1x8x128xf32> to vector<8x128xf32>
    %50 = vector.shape_cast %47 : vector<8x128xf32> to vector<1x8x128xf32>
    tpu.vector_store %arg6[%c0_35, %c0_36, %c0_37], %50 {strides = array<i32>} : memref<1x8x128xf32, #tpu.memory_space<vmem>>, vector<1x8x128xf32>,
    return
  }
  func.func @transform_1(%arg0: i32, %arg1: i32, %arg2: i32) -> (i32, i32, i32) {
    %c0_i32 = arith.constant 0 : i32
    %c0_i32_0 = arith.constant 0 : i32
    %c0_i32_1 = arith.constant 0 : i32
    return %c0_i32, %c0_i32_0, %arg0 : i32, i32, i32
  }
  func.func @transform_2(%arg0: i32, %arg1: i32, %arg2: i32) -> (i32, i32) {
    %c0_i32 = arith.constant 0 : i32
    %c0_i32_0 = arith.constant 0 : i32
    return %c0_i32, %arg0 : i32, i32
  }
  func.func @transform_3(%arg0: i32, %arg1: i32, %arg2: i32) -> (i32, i32, i32) {
    %c0_i32 = arith.constant 0 : i32
    return %arg1, %arg2, %arg0 : i32, i32, i32
  }
}

</mosaic_0001>

<llo_original>
// kernel: tpu_custom_call.1
$region0: #{tpu_custom_call.1}
  #allocation0 [shape = 'u32[]', space=smem, size = 0x4, offset = 0x4, fixed_abs, tag = 'smem constant byte address 0x4 - core index']
  #allocation1 [shape = 'u32[72,128]{1,0:T(1,128)}', space=vmem, size = 0x9000, scoped, tag = 'internal scratch']
  #allocation2 [shape = 'f32[2,10,128]{2,1,0:T(8,128)}', space=vmem, size = 0x4000, scoped, tag = 'scratch operand']
  #allocation3 [shape = 's32[2]{0}', space=sflag, size = 0x8, scoped, tag = 'scratch operand']
  #allocation8 [shape = 's32[]', space=sflag, size = 0x4, offset = 0, fixed_abs, tag = 'sflag constant byte address 0x0 - dummy sync flag']
  #allocation9 [shape = 's32[]', space=sflag, size = 0x4, offset = 0, fixed_abs, tag = 'sflag constant byte address 0x0 - dummy sync flag']
  %s0 = inlined_call_operand.vmem [shape: f32[2,26,128], index: 0, kind: input, shape index: {}]
  %s1 = inlined_call_operand.hbm [shape: f32[3,128,128], index: 1, kind: input, shape index: {}]
  %s2 = inlined_call_operand.vmem [shape: f32[1,128], index: 2, kind: input, shape index: {}]
  %s3 = inlined_call_operand.hbm [shape: f32[2,24,128], index: 3, kind: output, shape index: {}]
  %s4 = sld [smem:[#allocation0]]
  $region97: #{tpu_custom_call.1} parent=0
    _
  %s6 = ssub.s32 1, %s4
  %s7 = scalar_select 0, %s6, %s4
  $region1: #{tpu_custom_call.1} parent=0
    #allocation4 [shape = 'u8[196608]{0}', space=vmem, size = 0x30000, scoped, tag = 'input window, operand 1, single buffered']
    #allocation5 [shape = 's32[2]{0}', space=sflag, size = 0x8, scoped, tag = 'scoped memory for tpu_custom_call.1']
    #allocation6 [shape = 's32[2]{0}', space=sflag, size = 0x8, scoped, tag = 'scoped memory for tpu_custom_call.1']
    #allocation7 [shape = 'u8[8192]{0}', space=vmem, size = 0x2000, scoped, tag = 'output window, operand 0']
    %8 = vsyncpa [#allocation5], 0
    %9 = vsyncpa [#allocation6], 0
    %s10 = scalar_lea.sflag [#allocation6], 1
    %11 = vsyncpa %s10, 0
    loop: start=0, step=1, limit=8
    $region2: #{tpu_custom_call.1} parent=1 // loop_pre_header
      _
    $region3: #{tpu_custom_call.1} parent=1 // loop_header
      %s13 = sphi 0, %s17
      %p14 = scmp.ge.s32.totalorder %s13, 8
      %s20 = sphi 0, %s39
      %s21 = sphi 0, %s35
      %s22 = sphi 0, %s31
      %s23 = sphi 0, %s20
      %s24 = sphi 0, %s21
      %s25 = sphi 0, %s22
      %s26 = sphi 0, %s23
      %s27 = sphi 0, %s24
      %s28 = sphi 0, %s25
      %s42 = sphi 0, %s44
      %s45 = sphi 0, %s42
      %s46 = sphi 0, %s45
      %s62 = sphi 0, %s46
      %s68 = sphi 0, %s70
      %s71 = sphi 0, %s68
      %s72 = sphi 0, %s71
      %s88 = sphi 0, %s72
      %s98 = sphi 0, %s100
      %s101 = sphi 0, %s98
      %s102 = sphi 0, %s101
      %s118 = sphi 0, %s102
    $region4: #{tpu_custom_call.1} parent=1 // loop_header_branch
      %16 = sbr.rel (%p14) target = $region8
    $region5: #{tpu_custom_call.1} parent=1 // loop_body
      %s18 = ssub.s32 %s13, 1
      %s19 = ssub.s32 %s13, 2
      %s29 = sadd.s32 1, %s22
      %p30 = scmp.ge.s32.totalorder %s29, 3
      %s31 = scalar_select %p30, 0, %s29
      %s32 = sadd.s32 1, %s21
      %s33 = scalar_select %p30, %s32, %s21
      %p34 = scmp.ge.s32.totalorder %s33, 2
      %s35 = scalar_select %p34, 0, %s33
      %s36 = sadd.s32 1, %s20
      %s37 = scalar_select %p34, %s36, %s20
      %p38 = scmp.ge.s32.totalorder %s37, 1
      %s39 = scalar_select %p38, 0, %s37
      %s40 = ssub.s32 %s20, %s39
      %p41 = scmp.eq.s32.totalorder %s40, 0
      %s43 = sadd.s32 %s42, 1
      %s44 = scalar_select %p41, %s42, %s43
      %p47 = pneg %p41
      %p48 = scmp.eq.s32.totalorder %s13, 5
      %p49 = por %p47, %p48
      %p50 = scmp.ne.s32.totalorder %s42, %s45
      %p51 = scmp.eq.s32.totalorder %s13, 0
      %p52 = por %p50, %p51
      %p53 = scmp.ne.s32.totalorder %s42, %s45
      %p54 = scmp.eq.s32.totalorder %s18, 5
      %p55 = por %p53, %p54
      %p56 = scmp.ne.s32.totalorder %s45, %s46
      %p57 = scmp.eq.s32.totalorder %s18, 0
      %p58 = por %p56, %p57
      %p59 = scmp.ne.s32.totalorder %s45, %s46
      %p60 = scmp.eq.s32.totalorder %s19, 5
      %p61 = por %p59, %p60
      %p63 = scmp.ne.s32.totalorder %s46, %s62
      %p64 = scmp.eq.s32.totalorder %s19, 0
      %p65 = por %p63, %p64
      %s66 = ssub.s32 %s20, %s39
      %p67 = scmp.eq.s32.totalorder %s66, 0
      %s69 = sadd.s32 %s68, 1
      %s70 = scalar_select %p67, %s68, %s69
      %p73 = pneg %p67
      %p74 = scmp.eq.s32.totalorder %s13, 5
      %p75 = por %p73, %p74
      %p76 = scmp.ne.s32.totalorder %s68, %s71
      %p77 = scmp.eq.s32.totalorder %s13, 0
      %p78 = por %p76, %p77
      %p79 = scmp.ne.s32.totalorder %s68, %s71
      %p80 = scmp.eq.s32.totalorder %s18, 5
      %p81 = por %p79, %p80
      %p82 = scmp.ne.s32.totalorder %s71, %s72
      %p83 = scmp.eq.s32.totalorder %s18, 0
      %p84 = por %p82, %p83
      %p85 = scmp.ne.s32.totalorder %s71, %s72
      %p86 = scmp.eq.s32.totalorder %s19, 5
      %p87 = por %p85, %p86
      %p89 = scmp.ne.s32.totalorder %s72, %s88
      %p90 = scmp.eq.s32.totalorder %s19, 0
      %p91 = por %p89, %p90
      %s92 = ssub.s32 %s21, %s35
      %s93 = ssub.s32 %s22, %s31
      %s94 = sor.u32 %s92, %s93
      %s95 = ssub.s32 %s20, %s39
      %s96 = sor.u32 %s94, %s95
      %p97 = scmp.eq.s32.totalorder %s96, 0
      %s99 = sadd.s32 %s98, 1
      %s100 = scalar_select %p97, %s98, %s99
      %p103 = pneg %p97
      %p104 = scmp.eq.s32.totalorder %s13, 5
      %p105 = por %p103, %p104
      %p106 = scmp.ne.s32.totalorder %s98, %s101
      %p107 = scmp.eq.s32.totalorder %s13, 0
      %p108 = por %p106, %p107
      %p109 = scmp.ne.s32.totalorder %s98, %s101
      %p110 = scmp.eq.s32.totalorder %s18, 5
      %p111 = por %p109, %p110
      %p112 = scmp.ne.s32.totalorder %s101, %s102
      %p113 = scmp.eq.s32.totalorder %s18, 0
      %p114 = por %p112, %p113
      %p115 = scmp.ne.s32.totalorder %s101, %s102
      %p116 = scmp.eq.s32.totalorder %s19, 5
      %p117 = por %p115, %p116
      %p119 = scmp.ne.s32.totalorder %s102, %s118
      %p120 = scmp.eq.s32.totalorder %s19, 0
      %p121 = por %p119, %p120
      %p122 = scmp.le.s32.totalorder 1, %s13
      %p123 = scmp.lt.s32.totalorder %s13, 7
      %p124 = pnand %p122, %p123
      %p125 = pneg %p124
      // Predicated region
      $region9: #{tpu_custom_call.1} parent=5 // pred_check
        _
      $region10: #{tpu_custom_call.1} parent=5 // pred_check_branch
        %127 = sbr.rel (%p124) target = $region12
      $region11: #{tpu_custom_call.1} parent=5 // pred_region
        %s128 = ssub.s32 %s13, 1
        // Predicated region
        $region13: #{tpu_custom_call.1} parent=11 // pred_check
          %p129 = pneg %p58
        $region14: #{tpu_custom_call.1} parent=11 // pred_check_branch
          %131 = sbr.rel (%p129) target = $region16
        $region15: #{tpu_custom_call.1} parent=11 // pred_region
          %133 = vsyncadd [#allocation5], 0
          %s134 = smul.addr %s23, 8
          %s135 = scalar_lea.hbm %s1, %s134
          %s136 = sshll.u32 %s135, 4
          %s137 = int_to_ptr.hbm [resolvable:$true] %s136
          %s138 = sshll.u32 [#allocation4], 4
          %s139 = int_to_ptr.vmem [resolvable:$true] %s138
          %144 = dma.hbm_to_vmem [thread:$0]  %s137, 6144, %s139, [#allocation5], 128, 128, 8
        $region16: #{tpu_custom_call.1} parent=11 // pred_fallthru
          _
        // Predicated region
        $region17: #{tpu_custom_call.1} parent=11 // pred_check
          %p145 = pneg %p84
        $region18: #{tpu_custom_call.1} parent=11 // pred_check_branch
          %147 = sbr.rel (%p145) target = $region20
        $region19: #{tpu_custom_call.1} parent=11 // pred_region
          %p148 = scmp.lt.s32.totalorder %s23, 0
          %s149 = scalar_select %p148, %s23, 0
          %s150 = scalar_lea.vmem %s2, %s149
        $region20: #{tpu_custom_call.1} parent=11 // pred_fallthru
          _
      $region12: #{tpu_custom_call.1} parent=5 // pred_fallthru
        _
      %p151 = scmp.lt.s32.totalorder %s13, 6
      // Predicated region
      $region21: #{tpu_custom_call.1} parent=5 // pred_check
        %p152 = pneg %p151
      $region22: #{tpu_custom_call.1} parent=5 // pred_check_branch
        %154 = sbr.rel (%p152) target = $region24
      $region23: #{tpu_custom_call.1} parent=5 // pred_region
        _
      $region24: #{tpu_custom_call.1} parent=5 // pred_fallthru
        _
      %p155 = scmp.le.s32.totalorder 1, %s13
      %p156 = scmp.lt.s32.totalorder %s13, 7
      %p157 = pnand %p155, %p156
      %p158 = pneg %p157
      // Predicated region
      $region25: #{tpu_custom_call.1} parent=5 // pred_check
        _
      $region26: #{tpu_custom_call.1} parent=5 // pred_check_branch
        %160 = sbr.rel (%p157) target = $region28
      $region27: #{tpu_custom_call.1} parent=5 // pred_region
        %s161 = ssub.s32 %s13, 1
        // Predicated region
        $region29: #{tpu_custom_call.1} parent=27 // pred_check
          %p162 = pneg %p58
        $region30: #{tpu_custom_call.1} parent=27 // pred_check_branch
          %164 = sbr.rel (%p162) target = $region32
        $region31: #{tpu_custom_call.1} parent=27 // pred_region
          %166 = dma.done [#allocation5], 6144
        $region32: #{tpu_custom_call.1} parent=27 // pred_fallthru
          _
        %p167 = pneg %p58
        %p168 = pneg %p55
        %p169 = scmp.lt.s32.totalorder %s23, 0
        %s170 = scalar_select %p169, %s23, 0
        %s171 = scalar_lea.vmem %s2, %s170
        %p172 = pneg %p84
        %p173 = pneg %p81
        %p174 = pneg %p114
        %p175 = pneg %p111
        %s176 = sand.u32 %s101, 1
        %s177 = scalar_lea.sflag [#allocation6], %s176
        %s178 = sand.u32 %s101, 1
        %s179 = smul.addr %s178, 8
        %s180 = scalar_lea.vmem [#allocation7], %s179
        %p181 = scmp.lt.s32.totalorder %s23, 0
        %s182 = scalar_select %p181, %s23, 0
        %s183 = scalar_lea.vmem %s2, %s182
        %p184 = scmp.lt.s32.totalorder %s25, 0
        %s185 = ssub.s32 0, %s25
        %s186 = scalar_select %p184, %s185, %s25
        %s187 = sand.u32 %s186, 1
        %s188 = ssub.s32 0, %s187
        %s189 = scalar_select %p184, %s188, %s187
        %p190 = scmp.ne.s32.totalorder %s189, 0
        %p191 = scmp.lt.s32.totalorder %s189, 0
        %p192 = pnand %p191, %p190
        %p193 = pneg %p192
        %s194 = sadd.s32 %s189, 2
        %s195 = scalar_select %p193, %s194, %s189
        %p196 = scmp.eq.s32.totalorder %s25, 0
        // Predicated region
        $region33: #{tpu_custom_call.1} parent=27 // pred_check
          %p197 = pneg %p196
        $region34: #{tpu_custom_call.1} parent=27 // pred_check_branch
          %199 = sbr.rel (%p197) target = $region36
        $region35: #{tpu_custom_call.1} parent=27 // pred_region
          %s200 = smul.u32 %s24, 32
          %s201 = scalar_lea.vmem %s0, %s200
          // Predicated region
          $region37: #{tpu_custom_call.1} parent=35 // pred_check
            _
          $region38: #{tpu_custom_call.1} parent=35 // pred_check_branch
            %203 = sbr.rel (0) target = $region40
          $region39: #{tpu_custom_call.1} parent=35 // pred_region
            %s204 = scalar_lea.vmem %s201, 8
            %s205 = scalar_lea.vmem [#allocation2], 8
            loop: start=0, step=1, limit=1
            $region41: #{tpu_custom_call.1} parent=39 // loop_pre_header
              _
            $region42: #{tpu_custom_call.1} parent=39 // loop_header
              %s207 = sphi 0, %s211
              %p208 = scmp.ge.s32.totalorder %s207, 1
              %s212 = sphi %s201, %s201
              %s213 = sphi [#allocation2], [#allocation2]
            $region43: #{tpu_custom_call.1} parent=39 // loop_header_branch
              %210 = sbr.rel (%p208) target = $region47
            $region44: #{tpu_custom_call.1} parent=39 // loop_body
              %v214 = vld [vmem:[%s212] sm:$0xff]
              %215 = vst [vmem:[%s213] sm:$0xff] %v214
            $region45: #{tpu_custom_call.1} parent=39 // loop_footer
              %s211 = sadd.s32 1, %s207
            $region46: #{tpu_custom_call.1} parent=39 // loop_footer_branch
              %206 = sbr.rel target = $region42
            $region47: #{tpu_custom_call.1} parent=39 // loop_exit
              _
            %s217 = ssub.s32 4, 1
            loop: start=0, step=1, limit=1
            $region48: #{tpu_custom_call.1} parent=39 // loop_pre_header
              _
            $region49: #{tpu_custom_call.1} parent=39 // loop_header
              %s219 = sphi 0, %s223
              %p220 = scmp.ge.s32.totalorder %s219, 1
              %s224 = sphi %s204, %s204
              %s225 = sphi %s205, %s205
            $region50: #{tpu_custom_call.1} parent=39 // loop_header_branch
              %222 = sbr.rel (%p220) target = $region54
            $region51: #{tpu_custom_call.1} parent=39 // loop_body
              %v226 = vld [vmem:[%s224] sm:%s217]
              %227 = vst [vmem:[%s225] sm:%s217] %v226
            $region52: #{tpu_custom_call.1} parent=39 // loop_footer
              %s223 = sadd.s32 1, %s219
            $region53: #{tpu_custom_call.1} parent=39 // loop_footer_branch
              %218 = sbr.rel target = $region49
            $region54: #{tpu_custom_call.1} parent=39 // loop_exit
              _
          $region40: #{tpu_custom_call.1} parent=35 // pred_fallthru
            _
          // Predicated region
          $region55: #{tpu_custom_call.1} parent=35 // pred_check
            _
          $region56: #{tpu_custom_call.1} parent=35 // pred_check_branch
            %230 = sbr.rel (0) target = $region58
          $region57: #{tpu_custom_call.1} parent=35 // pred_region
            %231 = vsyncadd [#allocation3], 160
          $region58: #{tpu_custom_call.1} parent=35 // pred_fallthru
            _
        $region36: #{tpu_custom_call.1} parent=27 // pred_fallthru
          _
        %s232 = sadd.s32 %s25, 1
        %p233 = scmp.lt.s32.totalorder %s232, 3
        // Predicated region
        $region59: #{tpu_custom_call.1} parent=27 // pred_check
          %p234 = pneg %p233
        $region60: #{tpu_custom_call.1} parent=27 // pred_check_branch
          %236 = sbr.rel (%p234) target = $region62
        $region61: #{tpu_custom_call.1} parent=27 // pred_region
          %s237 = ssub.s32 1, %s195
          %s238 = smul.u32 %s232, 8
          %s239 = smul.u32 %s24, 32
          %s240 = sadd.s32 %s238, %s239
          %s241 = scalar_lea.vmem %s0, %s240
          %s242 = smul.u32 %s237, 16
          %s243 = scalar_lea.vmem [#allocation2], %s242
          %s244 = scalar_lea.sflag [#allocation3], %s237
          // Predicated region
          $region63: #{tpu_custom_call.1} parent=61 // pred_check
            _
          $region64: #{tpu_custom_call.1} parent=61 // pred_check_branch
            %246 = sbr.rel (0) target = $region66
          $region65: #{tpu_custom_call.1} parent=61 // pred_region
            %s247 = scalar_lea.vmem %s241, 8
            %s248 = scalar_lea.vmem %s243, 8 [#allocation2]
            loop: start=0, step=1, limit=1
            $region67: #{tpu_custom_call.1} parent=65 // loop_pre_header
              _
            $region68: #{tpu_custom_call.1} parent=65 // loop_header
              %s250 = sphi 0, %s254
              %p251 = scmp.ge.s32.totalorder %s250, 1
              %s255 = sphi %s241, %s241
              %s256 = sphi %s243, %s243
            $region69: #{tpu_custom_call.1} parent=65 // loop_header_branch
              %253 = sbr.rel (%p251) target = $region73
            $region70: #{tpu_custom_call.1} parent=65 // loop_body
              %v257 = vld [vmem:[%s255] sm:$0xff]
              %258 = vst [vmem:[%s256] sm:$0xff] %v257
            $region71: #{tpu_custom_call.1} parent=65 // loop_footer
              %s254 = sadd.s32 1, %s250
            $region72: #{tpu_custom_call.1} parent=65 // loop_footer_branch
              %249 = sbr.rel target = $region68
            $region73: #{tpu_custom_call.1} parent=65 // loop_exit
              _
            %s260 = ssub.s32 4, 1
            loop: start=0, step=1, limit=1
            $region74: #{tpu_custom_call.1} parent=65 // loop_pre_header
              _
            $region75: #{tpu_custom_call.1} parent=65 // loop_header
              %s262 = sphi 0, %s266
              %p263 = scmp.ge.s32.totalorder %s262, 1
              %s267 = sphi %s247, %s247
              %s268 = sphi %s248, %s248
            $region76: #{tpu_custom_call.1} parent=65 // loop_header_branch
              %265 = sbr.rel (%p263) target = $region80
            $region77: #{tpu_custom_call.1} parent=65 // loop_body
              %v269 = vld [vmem:[%s267] sm:%s260]
              %270 = vst [vmem:[%s268] sm:%s260] %v269
            $region78: #{tpu_custom_call.1} parent=65 // loop_footer
              %s266 = sadd.s32 1, %s262
            $region79: #{tpu_custom_call.1} parent=65 // loop_footer_branch
              %261 = sbr.rel target = $region75
            $region80: #{tpu_custom_call.1} parent=65 // loop_exit
              _
          $region66: #{tpu_custom_call.1} parent=61 // pred_fallthru
            _
          // Predicated region
          $region81: #{tpu_custom_call.1} parent=61 // pred_check
            _
          $region82: #{tpu_custom_call.1} parent=61 // pred_check_branch
            %273 = sbr.rel (0) target = $region84
          $region83: #{tpu_custom_call.1} parent=61 // pred_region
            %274 = vsyncadd %s244, 160
          $region84: #{tpu_custom_call.1} parent=61 // pred_fallthru
            _
        $region62: #{tpu_custom_call.1} parent=27 // pred_fallthru
          _
        %s275 = smul.u32 %s195, 16
        %s276 = scalar_lea.vmem [#allocation2], %s275
        %s277 = scalar_lea.sflag [#allocation3], %s195
        %s278 = smul.u32 10, 1
        %s279 = sshll.u32 %s278, 4
        %280 = dma.done %s277, %s279
        %v281 = vld [vmem:[%s276] sm:$0xff]
        %v282 = vld [vmem:[%s276 + $0x1] sm:$0xff]
        %v283 = vld [vmem:[%s276 + $0x2] sm:$0xff]
        %v284 = vld [vmem:[#allocation4] sm:$0xff]
        %v285 = vld [vmem:[#allocation4 + $0x8] sm:$0xff]
        %v286 = vld [vmem:[#allocation4 + $0x10] sm:$0xff]
        %v287 = vld [vmem:[#allocation4 + $0x18] sm:$0xff]
        %v288 = vld [vmem:[#allocation4 + $0x20] sm:$0xff]
        %v289 = vld [vmem:[#allocation4 + $0x28] sm:$0xff]
        %v290 = vld [vmem:[#allocation4 + $0x30] sm:$0xff]
        %v291 = vld [vmem:[#allocation4 + $0x38] sm:$0xff]
        %v292 = vld [vmem:[#allocation4 + $0x40] sm:$0xff]
        %v293 = vld [vmem:[#allocation4 + $0x48] sm:$0xff]
        %v294 = vld [vmem:[#allocation4 + $0x50] sm:$0xff]
        %v295 = vld [vmem:[#allocation4 + $0x58] sm:$0xff]
        %v296 = vld [vmem:[#allocation4 + $0x60] sm:$0xff]
        %v297 = vld [vmem:[#allocation4 + $0x68] sm:$0xff]
        %v298 = vld [vmem:[#allocation4 + $0x70] sm:$0xff]
        %v299 = vld [vmem:[#allocation4 + $0x78] sm:$0xff]
        %s300 = scalar_lea.vmem [#allocation4], 128
        %v301 = vld [vmem:[%s300] sm:$0xff]
        %v302 = vld [vmem:[%s300 + $0x8] sm:$0xff]
        %v303 = vld [vmem:[%s300 + $0x10] sm:$0xff]
        %v304 = vld [vmem:[%s300 + $0x18] sm:$0xff]
        %v305 = vld [vmem:[%s300 + $0x20] sm:$0xff]
        %v306 = vld [vmem:[%s300 + $0x28] sm:$0xff]
        %v307 = vld [vmem:[%s300 + $0x30] sm:$0xff]
        %v308 = vld [vmem:[%s300 + $0x38] sm:$0xff]
        %v309 = vld [vmem:[%s300 + $0x40] sm:$0xff]
        %v310 = vld [vmem:[%s300 + $0x48] sm:$0xff]
        %v311 = vld [vmem:[%s300 + $0x50] sm:$0xff]
        %v312 = vld [vmem:[%s300 + $0x58] sm:$0xff]
        %v313 = vld [vmem:[%s300 + $0x60] sm:$0xff]
        %v314 = vld [vmem:[%s300 + $0x68] sm:$0xff]
        %v315 = vld [vmem:[%s300 + $0x70] sm:$0xff]
        %v316 = vld [vmem:[%s300 + $0x78] sm:$0xff]
        %317 = vmatpush.msra.mxu0 %v316
        %318 = vmatpush.msra.mxu0 %v315
        %319 = vmatpush.msra.mxu0 %v314
        %320 = vmatpush.msra.mxu0 %v313
        %321 = vmatpush.msra.mxu0 %v312
        %322 = vmatpush.msra.mxu0 %v311
        %323 = vmatpush.msra.mxu0 %v310
        %324 = vmatpush.msra.mxu0 %v309
        %325 = vmatpush.msra.mxu0 %v308
        %326 = vmatpush.msra.mxu0 %v307
        %327 = vmatpush.msra.mxu0 %v306
        %328 = vmatpush.msra.mxu0 %v305
        %329 = vmatpush.msra.mxu0 %v304
        %330 = vmatpush.msra.mxu0 %v303
        %331 = vmatpush.msra.mxu0 %v302
        %332 = vmatpush.msra.mxu0 %v301
        %333 = vmatmul.f32.gmra.mxu0 %v282
        %v334 = vpop.f32.mrf.mxu0
        %v335 = vadd.f32 0.0, %v334
        %336 = vdwg.mxu0
        %337 = vmatpush.msra.mxu0 %v299
        %338 = vmatpush.msra.mxu0 %v298
        %339 = vmatpush.msra.mxu0 %v297
        %340 = vmatpush.msra.mxu0 %v296
        %341 = vmatpush.msra.mxu0 %v295
        %342 = vmatpush.msra.mxu0 %v294
        %343 = vmatpush.msra.mxu0 %v293
        %344 = vmatpush.msra.mxu0 %v292
        %345 = vmatpush.msra.mxu0 %v291
        %346 = vmatpush.msra.mxu0 %v290
        %347 = vmatpush.msra.mxu0 %v289
        %348 = vmatpush.msra.mxu0 %v288
        %349 = vmatpush.msra.mxu0 %v287
        %350 = vmatpush.msra.mxu0 %v286
        %351 = vmatpush.msra.mxu0 %v285
        %352 = vmatpush.msra.mxu0 %v284
        %353 = vmatmul.f32.gmra.mxu0 %v281
        %v354 = vpop.f32.mrf.mxu0
        %v355 = vadd.f32 %v335, %v354
        %356 = vdwg.mxu0
        %s357 = scalar_lea.vmem [#allocation4], 256
        %v358 = vld [vmem:[%s357] sm:$0xff]
        %v359 = vld [vmem:[%s357 + $0x8] sm:$0xff]
        %v360 = vld [vmem:[%s357 + $0x10] sm:$0xff]
        %v361 = vld [vmem:[%s357 + $0x18] sm:$0xff]
        %v362 = vld [vmem:[%s357 + $0x20] sm:$0xff]
        %v363 = vld [vmem:[%s357 + $0x28] sm:$0xff]
        %v364 = vld [vmem:[%s357 + $0x30] sm:$0xff]
        %v365 = vld [vmem:[%s357 + $0x38] sm:$0xff]
        %v366 = vld [vmem:[%s357 + $0x40] sm:$0xff]
        %v367 = vld [vmem:[%s357 + $0x48] sm:$0xff]
        %v368 = vld [vmem:[%s357 + $0x50] sm:$0xff]
        %v369 = vld [vmem:[%s357 + $0x58] sm:$0xff]
        %v370 = vld [vmem:[%s357 + $0x60] sm:$0xff]
        %v371 = vld [vmem:[%s357 + $0x68] sm:$0xff]
        %v372 = vld [vmem:[%s357 + $0x70] sm:$0xff]
        %v373 = vld [vmem:[%s357 + $0x78] sm:$0xff]
        %374 = vmatpush.msra.mxu0 %v373
        %375 = vmatpush.msra.mxu0 %v372
        %376 = vmatpush.msra.mxu0 %v371
        %377 = vmatpush.msra.mxu0 %v370
        %378 = vmatpush.msra.mxu0 %v369
        %379 = vmatpush.msra.mxu0 %v368
        %380 = vmatpush.msra.mxu0 %v367
        %381 = vmatpush.msra.mxu0 %v366
        %382 = vmatpush.msra.mxu0 %v365
        %383 = vmatpush.msra.mxu0 %v364
        %384 = vmatpush.msra.mxu0 %v363
        %385 = vmatpush.msra.mxu0 %v362
        %386 = vmatpush.msra.mxu0 %v361
        %387 = vmatpush.msra.mxu0 %v360
        %388 = vmatpush.msra.mxu0 %v359
        %389 = vmatpush.msra.mxu0 %v358
        %390 = vmatmul.f32.gmra.mxu0 %v283
        %v391 = vpop.f32.mrf.mxu0
        %v392 = vadd.f32 0.0, %v391
        %393 = vdwg.mxu0
        %v394 = vadd.f32 %v355, %v392
        %v395 = vld [vmem:[%s183] sm:$0x1]
        %v397 = vperm.slane %v395, 0
        %v399 = vadd.f32 %v394, %v397
        %v400 = vmax.f32 %v399, 0.0
        %401 = vst [vmem:[%s180] sm:$0xff] %v400
        %s402 = sand.u32 %s101, 1
        %s403 = scalar_lea.sflag [#allocation6], %s402
        %s404 = sand.u32 %s101, 1
        %s405 = smul.addr %s404, 8
        %s406 = scalar_lea.vmem [#allocation7], %s405
        // Predicated region
        $region85: #{tpu_custom_call.1} parent=27 // pred_check
          %p407 = pneg %p111
        $region86: #{tpu_custom_call.1} parent=27 // pred_check_branch
          %409 = sbr.rel (%p407) target = $region88
        $region87: #{tpu_custom_call.1} parent=27 // pred_region
          %411 = vsyncadd %s403, 0
          %s412 = sadd.s32 %s23, %s25
          %s413 = smul.addr %s24, 3
          %s414 = sadd.s32 %s412, %s413
          %s415 = smul.addr %s414, 8
          %s416 = scalar_lea.hbm %s3, %s415
          %s418 = sshll.u32 %s406, 4
          %s419 = int_to_ptr.vmem [resolvable:$true] %s418
          %s420 = sshll.u32 %s416, 4
          %s421 = int_to_ptr.hbm [resolvable:$true] %s420
          %423 = dma.vmem_to_hbm [thread:$0]  %s419, 128, %s421, %s403
        $region88: #{tpu_custom_call.1} parent=27 // pred_fallthru
          _
      $region28: #{tpu_custom_call.1} parent=5 // pred_fallthru
        _
      %p424 = scmp.le.s32.totalorder 2, %s13
      // Predicated region
      $region89: #{tpu_custom_call.1} parent=5 // pred_check
        %p425 = pneg %p424
      $region90: #{tpu_custom_call.1} parent=5 // pred_check_branch
        %427 = sbr.rel (%p425) target = $region92
      $region91: #{tpu_custom_call.1} parent=5 // pred_region
        %s428 = ssub.s32 %s13, 2
        // Predicated region
        $region93: #{tpu_custom_call.1} parent=91 // pred_check
          %p429 = pneg %p117
        $region94: #{tpu_custom_call.1} parent=91 // pred_check_branch
          %431 = sbr.rel (%p429) target = $region96
        $region95: #{tpu_custom_call.1} parent=91 // pred_region
          %s432 = sand.u32 %s102, 1
          %s433 = scalar_lea.sflag [#allocation6], %s432
          %s434 = sand.u32 %s102, 1
          %s435 = smul.addr %s434, 8
          %s436 = scalar_lea.vmem [#allocation7], %s435
          %438 = dma.done %s433, 128
        $region96: #{tpu_custom_call.1} parent=91 // pred_fallthru
          _
      $region92: #{tpu_custom_call.1} parent=5 // pred_fallthru
        _
    $region6: #{tpu_custom_call.1} parent=1 // loop_footer
      %s17 = sadd.s32 1, %s13
    $region7: #{tpu_custom_call.1} parent=1 // loop_footer_branch
      %12 = sbr.rel target = $region3
    $region8: #{tpu_custom_call.1} parent=1 // loop_exit
      _
    %439 = vsyncpa [#allocation5], 1
    %s440 = scalar_lea.sflag [#allocation5], 1
    %441 = vsyncpa %s440, 1
    %442 = vsyncpa [#allocation6], 1
    %s443 = scalar_lea.sflag [#allocation6], 1
    %444 = vsyncpa %s443, 1
  %445 = vsyncmov [#allocation3]
  %s446 = vpop.sfrf %445
  %p447 = scmp.eq.s32.totalorder %s446, 0
  %p448 = pneg %p447
  %450 = shalt.err (%p448)
  %s451 = scalar_lea.sflag [#allocation3], 1
  %452 = vsyncmov %s451
  %s453 = vpop.sfrf %452
  %p454 = scmp.eq.s32.totalorder %s453, 0
  %p455 = pneg %p454
  %457 = shalt.err (%p455)

</llo_original>
